<compile_context>
chip_gen: v6e
topology: v6e:2x2x1
jax: 0.10.0
libtpu: 0.0.40
codegen_flags: <defaults>
</compile_context>

<pallas_src>
from functools import partial

import jax
import jax.numpy as jnp
from jax import lax
from jax.experimental import pallas as pl
from jax.experimental.pallas import tpu as pltpu


def _round_up(x, m):
    return (x + m - 1) // m * m


def _pad_to(a, shape, dtype):
    """Zero-pad / cast `a` to (shape, dtype); no-op when already conforming."""
    shape = tuple(shape)
    if a.shape == shape:
        return a if a.dtype == jnp.dtype(dtype) else a.astype(dtype)
    out = jnp.zeros(shape, dtype)
    return out.at[tuple(slice(0, s) for s in a.shape)].set(a.astype(dtype))


# --------------------------- pass 1: edge accumulation ---------------------------
def _edge_kernel(x_ref, g_ref, bias_ref, edge_ref, *, mm_dtype):
    @pl.when(pl.program_id(1) == 0)          # node axis (reduction) is axis 1
    def _init():
        edge_ref[...] = jnp.zeros_like(edge_ref)

    # relu then bias (matches F.relu(x) followed by x + hgc1.bias); f32 elementwise.
    xb = jnp.maximum(x_ref[...].astype(jnp.float32), 0.0) + bias_ref[...]
    if mm_dtype is not None:                 # MXU operand in bf16; f32 accumulation
        xb = xb.astype(mm_dtype)
    g = g_ref[...]                           # already bf16 in HBM when mm_dtype set

    # edge_tile += G_tile^T @ xb without an in-kernel transpose: contract dim 0
    # of both operands directly on the MXU.
    edge_ref[...] += lax.dot_general(
        g, xb,
        dimension_numbers=(((0,), (0,)), ((), ())),
        preferred_element_type=jnp.float32)


# ------------------- pass 2: G @ edge -> softmax -> fc1 (p @ W^T) ----------------
def _node_kernel(g_ref, edge_ref, wt_ref, mbias_ref, out_ref, *,
                 need_mask, mm_dtype, approx_recip):
    xg = jnp.dot(g_ref[...], edge_ref[...],
                 preferred_element_type=jnp.float32)          # (tile_n, D_pad)

    if need_mask:
        # Additive -1e30 on padded feature lanes (single VPU add, replaces
        # iota/compare/where); exp underflows to exactly 0 on those lanes.
        xg = xg + mbias_ref[...]

    m = jnp.max(xg, axis=1, keepdims=True)
    e = jnp.exp(xg - m)
    s = jnp.sum(e, axis=1, keepdims=True)
    if approx_recip:
        p = e * pl.reciprocal(s, approx=True)  # EUP reciprocal, frees the VPU
    else:
        p = e / s

    if mm_dtype is not None:
        p = p.astype(mm_dtype)
    out = jnp.dot(p, wt_ref[...], preferred_element_type=jnp.float32)
    out_ref[...] = out.astype(out_ref.dtype)


def hgnn2_forward(x, G, bias, fc1_w, *, tile_n=None, matmul_dtype=None,
                  approx_softmax_recip=True, edge_tiles=None):
    """HGNN2 forward.  x:(N,D), G:(N,E), bias:(D,), fc1_w:(D,D) PyTorch layout.

    Returns (out:(N,D), edge:(E,D)).  matmul_dtype=jnp.bfloat16 enables the
    bf16-MXU / bf16-HBM-operand path (f32 accumulation) on v5e/v6e/v7x.
    """
    N, D = x.shape
    N2, E = G.shape
    assert N2 == N, "G must be (N, E)"

    f32 = jnp.float32
    mm = matmul_dtype
    g_dtype = mm if mm is not None else f32       # streamed G storage dtype
    ew_dtype = mm if mm is not None else f32      # pass-2 resident edge / fc1^T dtype

    # Lane-dense padding: features / hyperedges to multiples of 128 (lanes).
    D_pad = _round_up(D, 128)
    E_pad = _round_up(E, 128)

    # ---- generation-aware VMEM budget (v5e/v6e: 128 MiB, v7x: 64 MiB per TC) ----
    try:
        vmem_cap = int(pltpu.get_tpu_info().vmem_capacity_bytes)
    except Exception:
        vmem_cap = 128 * 1024 * 1024
    vmem_limit = min(int(vmem_cap * 0.84), vmem_cap - (8 << 20))

    # v7x-only: split pass 1's edge accumulator over E so both TCs run it.
    if edge_tiles is None:
        edge_tiles = 2 if (vmem_cap <= (80 << 20) and E_pad >= 256) else 1
    if (E_pad // 128) % edge_tiles != 0:
        edge_tiles = 1
    tile_e = E_pad // edge_tiles

    gb = jnp.dtype(g_dtype).itemsize
    eb = jnp.dtype(ew_dtype).itemsize
    ob = jnp.dtype(x.dtype).itemsize
    n_cap = max(8, _round_up(N, 8))

    # ---- pick the largest row tile that fits the VMEM budget (sweepable) ----
    if tile_n is None:
        tile_n = 8
        for cand in (512, 384, 256, 128, 64, 32, 16, 8):
            t = min(cand, n_cap)
            p1 = (2 * t * D_pad * 4            # x tile (f32), double-buffered
                  + 2 * t * tile_e * gb        # G tile, double-buffered
                  + 2 * D_pad * 4              # bias (resident)
                  + 2 * tile_e * D_pad * 4)    # edge accumulator (conservative 2x)
            p2 = (2 * t * E_pad * gb           # G tile, double-buffered
                  + 2 * E_pad * D_pad * eb     # resident edge (conservative 2x)
                  + 2 * D_pad * D_pad * eb     # resident fc1^T
                  + 2 * t * D_pad * ob         # out tile
                  + 2 * D_pad * 4)             # softmax mask vector
            if max(p1, p2) <= vmem_limit:
                tile_n = t
                break
        # TODO(synk): if even the smallest tile_n overflows (very large E*D
        # resident edge on v7x's 64 MiB), fall back to tiling D in pass 2
        # (column tiles of edge/fc1^T, softmax+fc1 on the last D step).
    tile_n = _round_up(min(tile_n, n_cap), 8)
    N_pad = _round_up(N, tile_n)
    n_tiles = N_pad // tile_n

    # ---- wrapper-side padding / dtype staging (skipped when already conforming) ----
    x_p = _pad_to(x, (N_pad, D_pad), f32)         # relu+bias stay f32 in-kernel
    g_p = _pad_to(G, (N_pad, E_pad), g_dtype)     # bf16 in HBM when matmul_dtype set
    bias_p = _pad_to(bias.astype(f32).reshape(1, D), (1, D_pad), f32)
    # fc1: Linear(D, D, bias=False); out = p @ W.T -> pre-transpose once here.
    wt_p = _pad_to(fc1_w.T, (D_pad, D_pad), ew_dtype)

    need_mask = D != D_pad
    if need_mask:
        mbias = jnp.full((1, D_pad), -1e30, f32).at[0, :D].set(0.0)
    else:
        mbias = jnp.zeros((1, D_pad), f32)

    # --------------------------- pass 1: edge ---------------------------
    edge_cost = pl.CostEstimate(
        flops=2 * N_pad * E_pad * D_pad,
        transcendentals=0,
        bytes_accessed=(4 * N_pad * D_pad * edge_tiles + gb * N_pad * E_pad
                        + 4 * E_pad * D_pad + 4 * D_pad),
    )
    edge_p = pl.pallas_call(
        partial(_edge_kernel, mm_dtype=mm),
        out_shape=jax.ShapeDtypeStruct((E_pad, D_pad), f32),
        grid_spec=pltpu.PrefetchScalarGridSpec(
            num_scalar_prefetch=0,
            grid=(edge_tiles, n_tiles),                      # reduction axis last
            in_specs=[
                pl.BlockSpec((tile_n, D_pad), lambda e, n: (n, 0)),   # x row-tile
                pl.BlockSpec((tile_n, tile_e), lambda e, n: (n, e)),  # G tile
                pl.BlockSpec((1, D_pad), lambda e, n: (0, 0)),        # bias
            ],
            out_specs=pl.BlockSpec((tile_e, D_pad), lambda e, n: (e, 0)),
        ),
        compiler_params=pltpu.CompilerParams(
            dimension_semantics=("parallel", "arbitrary"),
            vmem_limit_bytes=vmem_limit),
        cost_estimate=edge_cost,
    )(x_p, g_p, bias_p)

    # ------------ pass 2: out = softmax(G @ edge, axis=1) @ fc1_w.T ------------
    edge_in = edge_p if mm is None else edge_p.astype(mm)    # halve residency on bf16 path
    node_cost = pl.CostEstimate(
        flops=2 * N_pad * E_pad * D_pad + 2 * N_pad * D_pad * D_pad,
        transcendentals=N_pad * D_pad + N_pad,
        bytes_accessed=(gb * N_pad * E_pad + eb * E_pad * D_pad
                        + eb * D_pad * D_pad + ob * N_pad * D_pad),
    )
    out_p = pl.pallas_call(
        partial(_node_kernel, need_mask=need_mask, mm_dtype=mm,
                approx_recip=approx_softmax_recip),
        out_shape=jax.ShapeDtypeStruct((N_pad, D_pad), x.dtype),
        grid_spec=pltpu.PrefetchScalarGridSpec(
            num_scalar_prefetch=0,
            grid=(n_tiles,),
            in_specs=[
                pl.BlockSpec((tile_n, E_pad), lambda i: (i, 0)),   # G row-tile
                pl.BlockSpec((E_pad, D_pad), lambda i: (0, 0)),    # edge (resident)
                pl.BlockSpec((D_pad, D_pad), lambda i: (0, 0)),    # fc1_w^T (resident)
                pl.BlockSpec((1, D_pad), lambda i: (0, 0)),        # softmax mask bias
            ],
            out_specs=pl.BlockSpec((tile_n, D_pad), lambda i: (i, 0)),
        ),
        compiler_params=pltpu.CompilerParams(
            dimension_semantics=("parallel",),     # independent row tiles -> megacore
            vmem_limit_bytes=vmem_limit),
        cost_estimate=node_cost,
    )(g_p, edge_in, wt_p, mbias)

    out = out_p[:N, :D]
    edge = edge_p[:E, :D]
    if edge.dtype != x.dtype:
        edge = edge.astype(x.dtype)
    return out, edge


if __name__ == "__main__":
    # Small shapes consistent with the module: N nodes, E hyperedges, D=emb_dim.
    N, E, D = 16, 8, 32

    key = jax.random.PRNGKey(0)
    kx, kg, kb, kw = jax.random.split(key, 4)

    x = jax.random.normal(kx, (N, D), dtype=jnp.float32)
    G = jax.random.normal(kg, (N, E), dtype=jnp.float32)

    # Mirrors uniform(-stdv, stdv) init with stdv = 1/sqrt(D).
    stdv = 1.0 / (D ** 0.5)
    bias = jax.random.uniform(kb, (D,), minval=-stdv, maxval=stdv, dtype=jnp.float32)
    # fc1: nn.Linear(D, D, bias=False), weight shape (out_features, in_features).
    fc1_w = jax.random.uniform(kw, (D, D), minval=-stdv, maxval=stdv, dtype=jnp.float32)

    out_x, out_edge = hgnn2_forward(x, G, bias, fc1_w)
    jax.block_until_ready((out_x, out_edge))

    # Reference in plain JAX.
    xr = jnp.maximum(x, 0.0) + bias
    edge_ref = G.T @ xr
    xg_ref = G @ edge_ref
    p_ref = jax.nn.softmax(xg_ref, axis=1)
    out_ref = p_ref @ fc1_w.T

    assert out_x.shape == (N, D) and out_edge.shape == (E, D)
    assert jnp.allclose(out_edge, edge_ref, atol=1e-4, rtol=1e-4), "edge mismatch"
    # Tolerance accommodates the approximate EUP reciprocal in the softmax.
    assert jnp.allclose(out_x, out_ref, atol=5e-3, rtol=5e-3), "out mismatch"

    # Exercise the bf16-HBM-operand / bf16-MXU path (looser numerics).
    out_bf, edge_bf = hgnn2_forward(x, G, bias, fc1_w, matmul_dtype=jnp.bfloat16)
    jax.block_until_ready((out_bf, edge_bf))
    assert bool(jnp.isfinite(out_bf).all()) and bool(jnp.isfinite(edge_bf).all())
    assert jnp.allclose(out_bf, out_ref, atol=5e-2, rtol=5e-2), "bf16 out mismatch"

    # Exact-reciprocal softmax path (for gradient/parity use-cases).
    out_exact, _ = hgnn2_forward(x, G, bias, fc1_w, approx_softmax_recip=False)
    jax.block_until_ready(out_exact)
    assert jnp.allclose(out_exact, out_ref, atol=1e-4, rtol=1e-4), "exact out mismatch"

    print("KERNEL_OK")
</pallas_src>

<mosaic_0001>
module attributes {stable_mosaic.version = 11 : i64} {
  func.func @_edge_kernel(%arg0: i32, %arg1: i32, %arg2: memref<16x128xf32, #tpu.memory_space<vmem>>, %arg3: memref<16x128xf32, #tpu.memory_space<vmem>>, %arg4: memref<1x128xf32, #tpu.memory_space<vmem>>, %arg5: memref<128x128xf32, #tpu.memory_space<vmem>>) attributes {dimension_semantics = [#tpu.dimension_semantics<parallel>, #tpu.dimension_semantics<arbitrary>], iteration_bounds = array<i64: 1, 1>, scalar_prefetch = 0 : i64, scratch_operands = 0 : i64, tpu.core_type = #tpu.core_type<tc>, window_params = [{transform_indices = @transform_0, window_bounds = array<i64: 16, 128>}, {transform_indices = @transform_1, window_bounds = array<i64: 16, 128>}, {pipeline_mode = #tpu.pipeline_mode<synchronous>, transform_indices = @transform_2, window_bounds = array<i64: 1, 128>}, {transform_indices = @transform_3, window_bounds = array<i64: 128, 128>}]} {
    %c0_i32 = arith.constant 0 : i32
    %0 = arith.cmpi eq, %arg1, %c0_i32 : i32
    %1 = arith.extui %0 : i1 to i32
    %c0_i32_0 = arith.constant 0 : i32
    %2 = arith.cmpi ne, %1, %c0_i32_0 : i32
    scf.if %2 {
      %cst_11 = arith.constant 0.000000e+00 : f32
      %14 = vector.broadcast %cst_11 : f32 to vector<128x128xf32>
      %c0_12 = arith.constant 0 : index
      %c0_13 = arith.constant 0 : index
      %15 = vector.load %arg5[%c0_12, %c0_13] : memref<128x128xf32, #tpu.memory_space<vmem>>, vector<128x128xf32>
      tpu.vector_store %arg5[%c0_12, %c0_13], %14 {strides = array<i32>} : memref<128x128xf32, #tpu.memory_space<vmem>>, vector<128x128xf32>,
    } else {
    }
    %c0 = arith.constant 0 : index
    %c0_1 = arith.constant 0 : index
    %3 = vector.load %arg2[%c0, %c0_1] : memref<16x128xf32, #tpu.memory_space<vmem>>, vector<16x128xf32>
    %cst = arith.constant 0.000000e+00 : f32
    %4 = vector.broadcast %cst : f32 to vector<16x128xf32>
    %5 = arith.maximumf %3, %4 : vector<16x128xf32>
    %c0_2 = arith.constant 0 : index
    %c0_3 = arith.constant 0 : index
    %6 = vector.load %arg4[%c0_2, %c0_3] : memref<1x128xf32, #tpu.memory_space<vmem>>, vector<1x128xf32>
    %7 = vector.broadcast %6 : vector<1x128xf32> to vector<16x128xf32>
    %8 = arith.addf %5, %7 : vector<16x128xf32>
    %c0_4 = arith.constant 0 : index
    %c0_5 = arith.constant 0 : index
    %9 = vector.load %arg3[%c0_4, %c0_5] : memref<16x128xf32, #tpu.memory_space<vmem>>, vector<16x128xf32>
    %c0_6 = arith.constant 0 : index
    %c0_7 = arith.constant 0 : index
    %10 = vector.load %arg5[%c0_6, %c0_7] : memref<128x128xf32, #tpu.memory_space<vmem>>, vector<128x128xf32>
    %cst_8 = arith.constant dense<0.000000e+00> : vector<128x128xf32>
    %11 = tpu.matmul %9, %8, %cst_8 {dimension_numbers = #tpu.dot_dimension_numbers<[0], [0], [1], [1], [0, 1, 1, 1], [], []>} : vector<16x128xf32>, vector<16x128xf32>, vector<128x128xf32> -> vector<128x128xf32>
    %12 = arith.addf %10, %11 : vector<128x128xf32>
    %c0_9 = arith.constant 0 : index
    %c0_10 = arith.constant 0 : index
    %13 = vector.load %arg5[%c0_9, %c0_10] : memref<128x128xf32, #tpu.memory_space<vmem>>, vector<128x128xf32>
    tpu.vector_store %arg5[%c0_9, %c0_10], %12 {strides = array<i32>} : memref<128x128xf32, #tpu.memory_space<vmem>>, vector<128x128xf32>,
    return
  }
  func.func @transform_0(%arg0: i32, %arg1: i32) -> (i32, i32) {
    %c0_i32 = arith.constant 0 : i32
    %c0_i32_0 = arith.constant 0 : i32
    return %arg1, %c0_i32 : i32, i32
  }
  func.func @transform_1(%arg0: i32, %arg1: i32) -> (i32, i32) {
    %c0_i32 = arith.constant 0 : i32
    return %arg1, %arg0 : i32, i32
  }
  func.func @transform_2(%arg0: i32, %arg1: i32) -> (i32, i32) {
    %c0_i32 = arith.constant 0 : i32
    %c0_i32_0 = arith.constant 0 : i32
    %c0_i32_1 = arith.constant 0 : i32
    return %c0_i32, %c0_i32_0 : i32, i32
  }
  func.func @transform_3(%arg0: i32, %arg1: i32) -> (i32, i32) {
    %c0_i32 = arith.constant 0 : i32
    %c0_i32_0 = arith.constant 0 : i32
    return %arg0, %c0_i32 : i32, i32
  }
}

</mosaic_0001>

<llo_original>
// kernel: tpu_custom_call.1
$region0: #{tpu_custom_call.1}
  #allocation0 [shape = 'u32[]', space=smem, size = 0x4, offset = 0x4, fixed_abs, tag = 'smem constant byte address 0x4 - core index']
  #allocation1 [shape = 'u32[144,128]{1,0:T(1,128)}', space=vmem, size = 0x12000, scoped, tag = 'internal scratch']
  %s0 = inlined_call_operand.hbm [shape: f32[16,128], index: 0, kind: input, shape index: {}]
  %s1 = inlined_call_operand.hbm [shape: f32[16,128], index: 1, kind: input, shape index: {}]
  %s2 = inlined_call_operand.vmem [shape: f32[1,128], index: 2, kind: input, shape index: {}]
  %s3 = inlined_call_operand.hbm [shape: f32[128,128], index: 3, kind: output, shape index: {}]
  %s4 = sld [smem:[#allocation0]]
  $region34: #{tpu_custom_call.1} parent=0
    _
  %s6 = ssub.s32 1, %s4
  %s7 = scalar_select 0, %s6, %s4
  $region1: #{tpu_custom_call.1} parent=0
    #allocation2 [shape = 'u8[8192]{0}', space=vmem, size = 0x2000, scoped, tag = 'input window, operand 0, single buffered']
    #allocation3 [shape = 's32[1]{0}', space=sflag, size = 0x4, scoped, tag = 'scoped memory for tpu_custom_call.1']
    #allocation4 [shape = 's32[1]{0}', space=sflag, size = 0x4, scoped, tag = 'scoped memory for tpu_custom_call.1']
    #allocation5 [shape = 'u8[8192]{0}', space=vmem, size = 0x2000, scoped, tag = 'input window, operand 1, single buffered']
    #allocation6 [shape = 's32[1]{0}', space=sflag, size = 0x4, scoped, tag = 'scoped memory for tpu_custom_call.1']
    #allocation7 [shape = 'u8[65536]{0}', space=vmem, size = 0x10000, scoped, tag = 'output window, operand 0, single buffered']
    %8 = vsyncpa [#allocation3], 0
    %9 = vsyncpa [#allocation6], 0
    %10 = vsyncpa [#allocation4], 0
    // Predicated region
    $region2: #{tpu_custom_call.1} parent=1 // pred_check
      _
    $region3: #{tpu_custom_call.1} parent=1 // pred_check_branch
      %12 = sbr.rel (0) target = $region5
    $region4: #{tpu_custom_call.1} parent=1 // pred_region
      %s14 = ssub.s32 256, 256
      %15 = vsyncadd [#allocation3], %s14
      %s16 = sshll.u32 [#allocation2], 4
      %s17 = int_to_ptr.vmem [resolvable:$true] %s16
      %22 = dma.hbm_to_vmem [thread:$0]  %s0, 256, %s17, [#allocation3], 128, 128, 8
    $region5: #{tpu_custom_call.1} parent=1 // pred_fallthru
      _
    // Predicated region
    $region6: #{tpu_custom_call.1} parent=1 // pred_check
      _
    $region7: #{tpu_custom_call.1} parent=1 // pred_check_branch
      %24 = sbr.rel (0) target = $region9
    $region8: #{tpu_custom_call.1} parent=1 // pred_region
      %s26 = ssub.s32 256, 256
      %27 = vsyncadd [#allocation6], %s26
      %s28 = sshll.u32 [#allocation5], 4
      %s29 = int_to_ptr.vmem [resolvable:$true] %s28
      %34 = dma.hbm_to_vmem [thread:$0]  %s1, 256, %s29, [#allocation6], 128, 128, 8
    $region9: #{tpu_custom_call.1} parent=1 // pred_fallthru
      _
    // Predicated region
    $region10: #{tpu_custom_call.1} parent=1 // pred_check
      _
    $region11: #{tpu_custom_call.1} parent=1 // pred_check_branch
      %36 = sbr.rel (0) target = $region13
    $region12: #{tpu_custom_call.1} parent=1 // pred_region
      _
    $region13: #{tpu_custom_call.1} parent=1 // pred_fallthru
      _
    // Predicated region
    $region14: #{tpu_custom_call.1} parent=1 // pred_check
      _
    $region15: #{tpu_custom_call.1} parent=1 // pred_check_branch
      %38 = sbr.rel (0) target = $region17
    $region16: #{tpu_custom_call.1} parent=1 // pred_region
      %39 = dma.done [#allocation3], 256
    $region17: #{tpu_custom_call.1} parent=1 // pred_fallthru
      _
    // Predicated region
    $region18: #{tpu_custom_call.1} parent=1 // pred_check
      _
    $region19: #{tpu_custom_call.1} parent=1 // pred_check_branch
      %41 = sbr.rel (0) target = $region21
    $region20: #{tpu_custom_call.1} parent=1 // pred_region
      %42 = dma.done [#allocation6], 256
    $region21: #{tpu_custom_call.1} parent=1 // pred_fallthru
      _
    %p43 = scmp.eq.s32.totalorder 0, 0
    // Predicated region
    $region22: #{tpu_custom_call.1} parent=1 // pred_check
      %p44 = pneg %p43
    $region23: #{tpu_custom_call.1} parent=1 // pred_check_branch
      %46 = sbr.rel (%p44) target = $region25
    $region24: #{tpu_custom_call.1} parent=1 // pred_region
      %47 = vst [vmem:[#allocation7] sm:$0xff] 0.0
      %48 = vst [vmem:[#allocation7 + $0x8] sm:$0xff] 0.0
      %49 = vst [vmem:[#allocation7 + $0x10] sm:$0xff] 0.0
      %50 = vst [vmem:[#allocation7 + $0x18] sm:$0xff] 0.0
      %51 = vst [vmem:[#allocation7 + $0x20] sm:$0xff] 0.0
      %52 = vst [vmem:[#allocation7 + $0x28] sm:$0xff] 0.0
      %53 = vst [vmem:[#allocation7 + $0x30] sm:$0xff] 0.0
      %54 = vst [vmem:[#allocation7 + $0x38] sm:$0xff] 0.0
      %55 = vst [vmem:[#allocation7 + $0x40] sm:$0xff] 0.0
      %56 = vst [vmem:[#allocation7 + $0x48] sm:$0xff] 0.0
      %57 = vst [vmem:[#allocation7 + $0x50] sm:$0xff] 0.0
      %58 = vst [vmem:[#allocation7 + $0x58] sm:$0xff] 0.0
      %59 = vst [vmem:[#allocation7 + $0x60] sm:$0xff] 0.0
      %60 = vst [vmem:[#allocation7 + $0x68] sm:$0xff] 0.0
      %61 = vst [vmem:[#allocation7 + $0x70] sm:$0xff] 0.0
      %62 = vst [vmem:[#allocation7 + $0x78] sm:$0xff] 0.0
    $region25: #{tpu_custom_call.1} parent=1 // pred_fallthru
      _
    %v63 = vld [vmem:[#allocation2] sm:$0xff]
    %v64 = vld [vmem:[#allocation2 + $0x8] sm:$0xff]
    %v65 = vmax.f32 %v63, 0.0
    %v66 = vmax.f32 %v64, 0.0
    %v67 = vld [vmem:[%s2] sm:$0x1]
    %v69 = vlaneseq
    %v70 = vshrl.u32 %v69, 7
    %v71 = vsub.s32 0, %v70
    %v72 = vrot.slane %v67, %v71
    %v74 = vadd.f32 %v65, %v72
    %v75 = vadd.f32 %v66, %v72
    %v76 = vld [vmem:[#allocation5] sm:$0xff]
    %v77 = vld [vmem:[#allocation5 + $0x8] sm:$0xff]
    %v78 = vld [vmem:[#allocation7] sm:$0xff]
    %v79 = vld [vmem:[#allocation7 + $0x8] sm:$0xff]
    %v80 = vld [vmem:[#allocation7 + $0x10] sm:$0xff]
    %v81 = vld [vmem:[#allocation7 + $0x18] sm:$0xff]
    %v82 = vld [vmem:[#allocation7 + $0x20] sm:$0xff]
    %v83 = vld [vmem:[#allocation7 + $0x28] sm:$0xff]
    %v84 = vld [vmem:[#allocation7 + $0x30] sm:$0xff]
    %v85 = vld [vmem:[#allocation7 + $0x38] sm:$0xff]
    %v86 = vld [vmem:[#allocation7 + $0x40] sm:$0xff]
    %v87 = vld [vmem:[#allocation7 + $0x48] sm:$0xff]
    %v88 = vld [vmem:[#allocation7 + $0x50] sm:$0xff]
    %v89 = vld [vmem:[#allocation7 + $0x58] sm:$0xff]
    %v90 = vld [vmem:[#allocation7 + $0x60] sm:$0xff]
    %v91 = vld [vmem:[#allocation7 + $0x68] sm:$0xff]
    %v92 = vld [vmem:[#allocation7 + $0x70] sm:$0xff]
    %v93 = vld [vmem:[#allocation7 + $0x78] sm:$0xff]
    %94 = vxpose.xlu0.b32.start [1/16] %v76, 128
    %95 = vxpose.xlu0.b32.cont [2/16] %v77, 128
    %96 = vxpose.xlu0.b32.cont [3/16] 0.0, 128
    %97 = vxpose.xlu0.b32.cont [4/16] 0.0, 128
    %98 = vxpose.xlu0.b32.cont [5/16] 0.0, 128
    %99 = vxpose.xlu0.b32.cont [6/16] 0.0, 128
    %100 = vxpose.xlu0.b32.cont [7/16] 0.0, 128
    %101 = vxpose.xlu0.b32.cont [8/16] 0.0, 128
    %102 = vxpose.xlu0.b32.cont [9/16] 0.0, 128
    %103 = vxpose.xlu0.b32.cont [10/16] 0.0, 128
    %104 = vxpose.xlu0.b32.cont [11/16] 0.0, 128
    %105 = vxpose.xlu0.b32.cont [12/16] 0.0, 128
    %106 = vxpose.xlu0.b32.cont [13/16] 0.0, 128
    %107 = vxpose.xlu0.b32.cont [14/16] 0.0, 128
    %108 = vxpose.xlu0.b32.cont [15/16] 0.0, 128
    %109 = vxpose.xlu0.b32.end [16/16] 0.0, 128
    %v110 = vpop.trf.xlu0
    %v111 = vpop.trf.xlu0
    %v112 = vpop.trf.xlu0
    %v113 = vpop.trf.xlu0
    %v114 = vpop.trf.xlu0
    %v115 = vpop.trf.xlu0
    %v116 = vpop.trf.xlu0
    %v117 = vpop.trf.xlu0
    %v118 = vpop.trf.xlu0
    %v119 = vpop.trf.xlu0
    %v120 = vpop.trf.xlu0
    %v121 = vpop.trf.xlu0
    %v122 = vpop.trf.xlu0
    %v123 = vpop.trf.xlu0
    %v124 = vpop.trf.xlu0
    %v125 = vpop.trf.xlu0
    %vm126 = vcmask 130048
    %v128 = vsel %vm126, %v110, 0
    %v131 = vsel %vm126, %v111, 0
    %v134 = vsel %vm126, %v112, 0
    %v137 = vsel %vm126, %v113, 0
    %v140 = vsel %vm126, %v114, 0
    %v143 = vsel %vm126, %v115, 0
    %v146 = vsel %vm126, %v116, 0
    %v149 = vsel %vm126, %v117, 0
    %v152 = vsel %vm126, %v118, 0
    %v155 = vsel %vm126, %v119, 0
    %v158 = vsel %vm126, %v120, 0
    %v161 = vsel %vm126, %v121, 0
    %v164 = vsel %vm126, %v122, 0
    %v167 = vsel %vm126, %v123, 0
    %v170 = vsel %vm126, %v124, 0
    %v173 = vsel %vm126, %v125, 0
    %175 = vmatprep.subr.mxu0 0.0
    %176 = vmatpush1.msra.mxu0 0.0
    %177 = vmatprep.subr.mxu0 0.0
    %178 = vmatpush1.msra.mxu0 0.0
    %179 = vmatprep.subr.mxu0 0.0
    %180 = vmatpush1.msra.mxu0 0.0
    %181 = vmatprep.subr.mxu0 0.0
    %182 = vmatpush1.msra.mxu0 0.0
    %183 = vmatprep.subr.mxu0 0.0
    %184 = vmatpush1.msra.mxu0 0.0
    %185 = vmatprep.subr.mxu0 0.0
    %186 = vmatpush1.msra.mxu0 0.0
    %187 = vmatprep.subr.mxu0 0.0
    %188 = vmatpush1.msra.mxu0 0.0
    %189 = vmatprep.subr.mxu0 0.0
    %190 = vmatpush1.msra.mxu0 0.0
    %191 = vmatprep.subr.mxu0 0.0
    %192 = vmatpush1.msra.mxu0 0.0
    %193 = vmatprep.subr.mxu0 0.0
    %194 = vmatpush1.msra.mxu0 0.0
    %195 = vmatprep.subr.mxu0 0.0
    %196 = vmatpush1.msra.mxu0 0.0
    %197 = vmatprep.subr.mxu0 0.0
    %198 = vmatpush1.msra.mxu0 0.0
    %199 = vmatprep.subr.mxu0 0.0
    %200 = vmatpush1.msra.mxu0 0.0
    %201 = vmatprep.subr.mxu0 0.0
    %202 = vmatpush1.msra.mxu0 0.0
    %203 = vmatprep.subr.mxu0 0.0
    %204 = vmatpush1.msra.mxu0 %v75
    %205 = vmatprep.subr.mxu0 0.0
    %206 = vmatpush1.msra.mxu0 %v74
    %207 = vmatprep.subr.mxu0 0.0
    %208 = vmatpush2.msra.mxu0 0.0
    %209 = vmatprep.subr.mxu0 0.0
    %210 = vmatpush2.msra.mxu0 0.0
    %211 = vmatprep.subr.mxu0 0.0
    %212 = vmatpush2.msra.mxu0 0.0
    %213 = vmatprep.subr.mxu0 0.0
    %214 = vmatpush2.msra.mxu0 0.0
    %215 = vmatprep.subr.mxu0 0.0
    %216 = vmatpush2.msra.mxu0 0.0
    %217 = vmatprep.subr.mxu0 0.0
    %218 = vmatpush2.msra.mxu0 0.0
    %219 = vmatprep.subr.mxu0 0.0
    %220 = vmatpush2.msra.mxu0 0.0
    %221 = vmatprep.subr.mxu0 0.0
    %222 = vmatpush2.msra.mxu0 0.0
    %223 = vmatprep.subr.mxu0 0.0
    %224 = vmatpush2.msra.mxu0 0.0
    %225 = vmatprep.subr.mxu0 0.0
    %226 = vmatpush2.msra.mxu0 0.0
    %227 = vmatprep.subr.mxu0 0.0
    %228 = vmatpush2.msra.mxu0 0.0
    %229 = vmatprep.subr.mxu0 0.0
    %230 = vmatpush2.msra.mxu0 0.0
    %231 = vmatprep.subr.mxu0 0.0
    %232 = vmatpush2.msra.mxu0 0.0
    %233 = vmatprep.subr.mxu0 0.0
    %234 = vmatpush2.msra.mxu0 0.0
    %235 = vmatprep.subr.mxu0 0.0
    %236 = vmatpush2.msra.mxu0 0.0
    %237 = vmatprep.subr.mxu0 0.0
    %238 = vmatpush2.msra.mxu0 0.0
    %239 = vmatprep.mubr.f32.mxu0 0.0
    %240 = vmatmul.mubr.f32.gmra.mxu0 %v128
    %v241 = vpop.f32.mrf.mxu0
    %v242 = vadd.f32 0.0, %v241
    %v243 = vpop.f32.mrf.mxu0
    %244 = vmatprep.mubr.f32.mxu0 0.0
    %245 = vmatmul.mubr.f32.gmra.mxu0 %v131
    %v246 = vpop.f32.mrf.mxu0
    %v247 = vadd.f32 0.0, %v246
    %v248 = vpop.f32.mrf.mxu0
    %249 = vmatprep.mubr.f32.mxu0 0.0
    %250 = vmatmul.mubr.f32.gmra.mxu0 %v134
    %v251 = vpop.f32.mrf.mxu0
    %v252 = vadd.f32 0.0, %v251
    %v253 = vpop.f32.mrf.mxu0
    %254 = vmatprep.mubr.f32.mxu0 0.0
    %255 = vmatmul.mubr.f32.gmra.mxu0 %v137
    %v256 = vpop.f32.mrf.mxu0
    %v257 = vadd.f32 0.0, %v256
    %v258 = vpop.f32.mrf.mxu0
    %259 = vmatprep.mubr.f32.mxu0 0.0
    %260 = vmatmul.mubr.f32.gmra.mxu0 %v140
    %v261 = vpop.f32.mrf.mxu0
    %v262 = vadd.f32 0.0, %v261
    %v263 = vpop.f32.mrf.mxu0
    %264 = vmatprep.mubr.f32.mxu0 0.0
    %265 = vmatmul.mubr.f32.gmra.mxu0 %v143
    %v266 = vpop.f32.mrf.mxu0
    %v267 = vadd.f32 0.0, %v266
    %v268 = vpop.f32.mrf.mxu0
    %269 = vmatprep.mubr.f32.mxu0 0.0
    %270 = vmatmul.mubr.f32.gmra.mxu0 %v146
    %v271 = vpop.f32.mrf.mxu0
    %v272 = vadd.f32 0.0, %v271
    %v273 = vpop.f32.mrf.mxu0
    %274 = vmatprep.mubr.f32.mxu0 0.0
    %275 = vmatmul.mubr.f32.gmra.mxu0 %v149
    %v276 = vpop.f32.mrf.mxu0
    %v277 = vadd.f32 0.0, %v276
    %v278 = vpop.f32.mrf.mxu0
    %279 = vmatprep.mubr.f32.mxu0 0.0
    %280 = vmatmul.mubr.f32.gmra.mxu0 %v152
    %v281 = vpop.f32.mrf.mxu0
    %v282 = vadd.f32 0.0, %v281
    %v283 = vpop.f32.mrf.mxu0
    %284 = vmatprep.mubr.f32.mxu0 0.0
    %285 = vmatmul.mubr.f32.gmra.mxu0 %v155
    %v286 = vpop.f32.mrf.mxu0
    %v287 = vadd.f32 0.0, %v286
    %v288 = vpop.f32.mrf.mxu0
    %289 = vmatprep.mubr.f32.mxu0 0.0
    %290 = vmatmul.mubr.f32.gmra.mxu0 %v158
    %v291 = vpop.f32.mrf.mxu0
    %v292 = vadd.f32 0.0, %v291
    %v293 = vpop.f32.mrf.mxu0
    %294 = vmatprep.mubr.f32.mxu0 0.0
    %295 = vmatmul.mubr.f32.gmra.mxu0 %v161
    %v296 = vpop.f32.mrf.mxu0
    %v297 = vadd.f32 0.0, %v296
    %v298 = vpop.f32.mrf.mxu0
    %299 = vmatprep.mubr.f32.mxu0 0.0
    %300 = vmatmul.mubr.f32.gmra.mxu0 %v164
    %v301 = vpop.f32.mrf.mxu0
    %v302 = vadd.f32 0.0, %v301
    %v303 = vpop.f32.mrf.mxu0
    %304 = vmatprep.mubr.f32.mxu0 0.0
    %305 = vmatmul.mubr.f32.gmra.mxu0 %v167
    %v306 = vpop.f32.mrf.mxu0
    %v307 = vadd.f32 0.0, %v306
    %v308 = vpop.f32.mrf.mxu0
    %309 = vmatprep.mubr.f32.mxu0 0.0
    %310 = vmatmul.mubr.f32.gmra.mxu0 %v170
    %v311 = vpop.f32.mrf.mxu0
    %v312 = vadd.f32 0.0, %v311
    %v313 = vpop.f32.mrf.mxu0
    %314 = vmatprep.mubr.f32.mxu0 0.0
    %315 = vmatmul.mubr.f32.gmra.mxu0 %v173
    %v316 = vpop.f32.mrf.mxu0
    %v317 = vadd.f32 0.0, %v316
    %v318 = vpop.f32.mrf.mxu0
    %319 = vdwg.mxu0
    %v320 = vadd.f32 %v78, %v242
    %v321 = vadd.f32 %v79, %v247
    %v322 = vadd.f32 %v80, %v252
    %v323 = vadd.f32 %v81, %v257
    %v324 = vadd.f32 %v82, %v262
    %v325 = vadd.f32 %v83, %v267
    %v326 = vadd.f32 %v84, %v272
    %v327 = vadd.f32 %v85, %v277
    %v328 = vadd.f32 %v86, %v282
    %v329 = vadd.f32 %v87, %v287
    %v330 = vadd.f32 %v88, %v292
    %v331 = vadd.f32 %v89, %v297
    %v332 = vadd.f32 %v90, %v302
    %v333 = vadd.f32 %v91, %v307
    %v334 = vadd.f32 %v92, %v312
    %v335 = vadd.f32 %v93, %v317
    %336 = vst [vmem:[#allocation7] sm:$0xff] %v320
    %337 = vst [vmem:[#allocation7 + $0x8] sm:$0xff] %v321
    %338 = vst [vmem:[#allocation7 + $0x10] sm:$0xff] %v322
    %339 = vst [vmem:[#allocation7 + $0x18] sm:$0xff] %v323
    %340 = vst [vmem:[#allocation7 + $0x20] sm:$0xff] %v324
    %341 = vst [vmem:[#allocation7 + $0x28] sm:$0xff] %v325
    %342 = vst [vmem:[#allocation7 + $0x30] sm:$0xff] %v326
    %343 = vst [vmem:[#allocation7 + $0x38] sm:$0xff] %v327
    %344 = vst [vmem:[#allocation7 + $0x40] sm:$0xff] %v328
    %345 = vst [vmem:[#allocation7 + $0x48] sm:$0xff] %v329
    %346 = vst [vmem:[#allocation7 + $0x50] sm:$0xff] %v330
    %347 = vst [vmem:[#allocation7 + $0x58] sm:$0xff] %v331
    %348 = vst [vmem:[#allocation7 + $0x60] sm:$0xff] %v332
    %349 = vst [vmem:[#allocation7 + $0x68] sm:$0xff] %v333
    %350 = vst [vmem:[#allocation7 + $0x70] sm:$0xff] %v334
    %351 = vst [vmem:[#allocation7 + $0x78] sm:$0xff] %v335
    // Predicated region
    $region26: #{tpu_custom_call.1} parent=1 // pred_check
      _
    $region27: #{tpu_custom_call.1} parent=1 // pred_check_branch
      %353 = sbr.rel (0) target = $region29
    $region28: #{tpu_custom_call.1} parent=1 // pred_region
      %s355 = ssub.s32 2048, 2048
      %356 = vsyncadd [#allocation4], %s355
      %s357 = sshll.u32 [#allocation7], 4
      %s358 = int_to_ptr.vmem [resolvable:$true] %s357
      %363 = dma.vmem_to_hbm [thread:$0]  %s358, 2048, %s3, [#allocation4], 128, 128, 8
    $region29: #{tpu_custom_call.1} parent=1 // pred_fallthru
      _
    // Predicated region
    $region30: #{tpu_custom_call.1} parent=1 // pred_check
      _
    $region31: #{tpu_custom_call.1} parent=1 // pred_check_branch
      %365 = sbr.rel (0) target = $region33
    $region32: #{tpu_custom_call.1} parent=1 // pred_region
      %366 = dma.done [#allocation4], 2048
    $region33: #{tpu_custom_call.1} parent=1 // pred_fallthru
      _
    %367 = vsyncpa [#allocation3], 1
    %368 = vsyncpa [#allocation6], 1
    %369 = vsyncpa [#allocation4], 1

</llo_original>
